<compile_context>
chip_gen: v6e
topology: v6e:2x2x1
jax: 0.10.0
libtpu: 0.0.40
codegen_flags: <defaults>
</compile_context>

<pallas_src>
import functools

import jax
import jax.numpy as jnp
from jax.experimental import pallas as pl
from jax.experimental.pallas import tpu as pltpu

LANE = 128      # vreg lane width
SUBLANE = 8     # f32 sublane count


def _round_up(x, m):
    return (x + m - 1) // m * m


def _cdiv(a, b):
    return -(-a // b)


def value_net_kernel(s_ref, a_ref, w1s_ref, w1a_ref, b1_ref,
                     w2_ref, b2_ref, w3r_ref, b3_ref, o_ref):
    """One batch tile: (TB, n_in), (TB, n_act) -> lane-dense (1, TB) output row."""
    cdt = w1s_ref.dtype  # MXU compute dtype (bf16)

    # ---- linear1 + ReLU -----------------------------------------------------
    # Split over the state/action column blocks of W1: identical math to
    # concat([s, a], 1) @ W1 with no HBM concat and no unaligned lane concat.
    h1 = jnp.dot(s_ref[...].astype(cdt), w1s_ref[...],
                 preferred_element_type=jnp.float32)
    h1 += jnp.dot(a_ref[...].astype(cdt), w1a_ref[...],
                  preferred_element_type=jnp.float32)
    h1 = jnp.maximum(h1 + b1_ref[...], 0.0)          # f32 bias + ReLU (VPU)

    # ---- linear2 + ReLU -----------------------------------------------------
    h2 = jnp.dot(h1.astype(cdt), w2_ref[...],
                 preferred_element_type=jnp.float32)
    h2 = jnp.maximum(h2 + b2_ref[...], 0.0)

    # ---- linear3: contraction on the LAST dim of both operands (q @ k.T
    # style) so the result comes out batch-on-lanes: (8, H) x (TB, H) ->
    # (8, TB).  Only row 0 of w3r is real (rest zero-padded for full-sublane
    # LHS); storing that single row is a lane-dense (1, TB) writeback —
    # 4 B/row of HBM instead of a 512 B/row padded-f32 tile.
    o = jax.lax.dot_general(
        w3r_ref[...], h2.astype(cdt),
        dimension_numbers=(((1,), (1,)), ((), ())),
        preferred_element_type=jnp.float32)
    o_ref[0] = o[0:1, :] + b3_ref[...]


def init_params(key, num_inputs, num_actions, hidden_size, init_w=0.003):
    """f32 params in (in, out) layout, mirroring the PyTorch module's init."""
    k1, k2, k3, k4, k5, k6 = jax.random.split(key, 6)
    d_in = num_inputs + num_actions

    def unif(k, shape, bound):
        return jax.random.uniform(k, shape, jnp.float32, -bound, bound)

    bound1 = 1.0 / float(d_in) ** 0.5
    bound2 = 1.0 / float(hidden_size) ** 0.5
    w1 = unif(k1, (d_in, hidden_size), bound1)
    b1 = unif(k2, (1, hidden_size), bound1)
    w2 = unif(k3, (hidden_size, hidden_size), bound2)
    b2 = unif(k4, (1, hidden_size), bound2)
    w3 = unif(k5, (hidden_size, 1), init_w)
    b3 = unif(k6, (1, 1), init_w)
    return (w1, b1, w2, b2, w3, b3)


def prepare_params(params, num_inputs, num_actions, compute_dtype=jnp.bfloat16):
    """Split W1, pad hidden dim to 128 lanes, cast weights for the MXU.

    Zero padding keeps the math exact: padded hidden columns come out of ReLU
    as ReLU(0 + 0) = 0 and the corresponding zero entries of the padded W3 row
    contribute nothing.  Done once, outside the hot path; activations are
    never padded on the feature dim.
    NOTE: bf16 weights (incl. W3 with init_w=0.003) differ from a pure-f32
    PyTorch forward by ~1e-3 relative — acceptable for a DDPG critic.
    """
    w1, b1, w2, b2, w3, b3 = params
    hidden = w1.shape[1]
    h_pad = _round_up(hidden, LANE)

    def pad2(x, rows, cols):
        return jnp.pad(x, ((0, rows - x.shape[0]), (0, cols - x.shape[1])))

    w1_s = pad2(w1[:num_inputs], num_inputs, h_pad).astype(compute_dtype)
    w1_a = pad2(w1[num_inputs:], num_actions, h_pad).astype(compute_dtype)
    b1_p = pad2(b1, 1, h_pad)                       # biases stay f32 (VPU adds)
    w2_p = pad2(w2, h_pad, h_pad).astype(compute_dtype)
    b2_p = pad2(b2, 1, h_pad)
    # W3 as a row, zero-padded to (8, h_pad): row 0 real, rows 1..7 zero, so
    # the final transposed-RHS matmul has a full-sublane LHS.
    w3_r = pad2(w3.T, SUBLANE, h_pad).astype(compute_dtype)
    b3_p = b3.reshape(1, 1).astype(jnp.float32)
    return (w1_s, w1_a, b1_p, w2_p, b2_p, w3_r, b3_p)


@functools.partial(jax.jit, static_argnames=("block_b",))
def value_network_forward(state, action, prepared, *, block_b=4096):
    """state: (B, num_inputs), action: (B, num_actions) -> (B, 1) float32."""
    w1_s, w1_a, b1, w2, b2, w3r, b3 = prepared
    B, n_in = state.shape
    _, n_act = action.shape
    h_pad = w1_s.shape[1]

    # ---- batch-tile selection ------------------------------------------
    #  * multiple of 128 so the (1, TB) output row is lane-dense.
    #  * large by default (4096, cap 8192) to amortize the ~0.35 µs/step grid
    #    overhead; ~3 KB VMEM per row keeps even 8192 rows under the 48 MiB
    #    budget (safe for v7x's 64 MiB physical VMEM).
    #  * if the whole batch fits in one tile but is big enough to split,
    #    use exactly two tiles so v7x's 2 TensorCores both get work.
    tb_cap = _round_up(max(LANE, min(block_b, 8192)), LANE)
    b_ceil = _round_up(B, LANE)
    if b_ceil <= tb_cap:
        if B >= 2048:
            tb = _round_up(_cdiv(B, 2), LANE)   # two tiles for v7x megacore
        else:
            tb = b_ceil                          # single tile; overhead-bound anyway
    else:
        tb = tb_cap
    num_tiles = _cdiv(B, tb)
    # No jnp.pad of state/action for ragged B: the edge tile reads OOB rows
    # (undefined values); all ops are row-independent and we slice to B below.

    tile = lambda r, c: pl.BlockSpec((r, c), lambda i: (i, 0))     # batch-tiled
    const = lambda r, c: pl.BlockSpec((r, c), lambda i: (0, 0))    # VMEM-resident

    out = pl.pallas_call(
        value_net_kernel,
        out_shape=jax.ShapeDtypeStruct((num_tiles, 1, tb), jnp.float32),
        grid=(num_tiles,),
        in_specs=[
            tile(tb, n_in),            # state tile
            tile(tb, n_act),           # action tile
            const(n_in, h_pad),        # W1[:num_inputs]
            const(n_act, h_pad),       # W1[num_inputs:]
            const(1, h_pad),           # b1
            const(h_pad, h_pad),       # W2
            const(1, h_pad),           # b2
            const(SUBLANE, h_pad),     # W3 as padded row block (row 0 real)
            const(1, 1),               # b3
        ],
        out_specs=pl.BlockSpec((1, 1, tb), lambda i: (i, 0, 0)),
        compiler_params=pltpu.CompilerParams(
            dimension_semantics=("parallel",),       # megacore split on v7x
            vmem_limit_bytes=48 * 1024 * 1024,       # headroom on v7x 64 MiB
        ),
    )(state, action, w1_s, w1_a, b1, w2, b2, w3r, b3)

    # (num_tiles, 1, tb) -> (num_tiles*tb, 1): free row-major reshape; slice
    # drops the ragged-edge garbage rows.
    return out.reshape(num_tiles * tb, 1)[:B]


def value_network_ref(state, action, params, compute_dtype=jnp.bfloat16):
    """Pure-JAX reference mirroring the kernel's dtype policy (bf16 MXU, f32 acc)."""
    w1, b1, w2, b2, w3, b3 = params
    x = jnp.concatenate([state, action], axis=1)
    dot = lambda a, w: jnp.dot(a.astype(compute_dtype), w.astype(compute_dtype),
                               preferred_element_type=jnp.float32)
    h1 = jnp.maximum(dot(x, w1) + b1, 0.0)
    h2 = jnp.maximum(dot(h1, w2) + b2, 0.0)
    return dot(h2, w3) + b3


if __name__ == "__main__":
    # Small shapes consistent with the module's forward:
    #   state: (B, num_inputs), action: (B, num_actions), hidden_size = H.
    # B is deliberately not a multiple of the batch tile to exercise the
    # ragged (un-padded) edge-tile path.
    B, num_inputs, num_actions, H = 200, 24, 8, 32

    key = jax.random.PRNGKey(0)
    k_state, k_action, k_params = jax.random.split(key, 3)

    state = jax.random.normal(k_state, (B, num_inputs), jnp.float32)
    action = jax.random.normal(k_action, (B, num_actions), jnp.float32)
    params = init_params(k_params, num_inputs, num_actions, H, init_w=0.003)
    prepared = prepare_params(params, num_inputs, num_actions)
    ref = value_network_ref(state, action, params)

    # Default (large-tile, single-step) configuration.
    out = jax.block_until_ready(value_network_forward(state, action, prepared))
    assert out.shape == (B, 1), out.shape
    assert jnp.allclose(out, ref, atol=1e-3, rtol=1e-3), (
        f"mismatch (default tile), max abs err = {float(jnp.max(jnp.abs(out - ref)))}")

    # Extra correctness check of the multi-tile + ragged-edge path (grid=(2,),
    # last tile only partially valid). Perf configs should use the default.
    out2 = jax.block_until_ready(
        value_network_forward(state, action, prepared, block_b=128))
    assert out2.shape == (B, 1), out2.shape
    assert jnp.allclose(out2, ref, atol=1e-3, rtol=1e-3), (
        f"mismatch (multi-tile), max abs err = {float(jnp.max(jnp.abs(out2 - ref)))}")

    print("KERNEL_OK")
</pallas_src>

<mosaic_0001>
module attributes {stable_mosaic.version = 11 : i64} {
  func.func @value_net_kernel(%arg0: i32, %arg1: memref<256x24xf32, #tpu.memory_space<vmem>>, %arg2: memref<256x8xf32, #tpu.memory_space<vmem>>, %arg3: memref<24x128xbf16, #tpu.memory_space<vmem>>, %arg4: memref<8x128xbf16, #tpu.memory_space<vmem>>, %arg5: memref<1x128xf32, #tpu.memory_space<vmem>>, %arg6: memref<128x128xbf16, #tpu.memory_space<vmem>>, %arg7: memref<1x128xf32, #tpu.memory_space<vmem>>, %arg8: memref<8x128xbf16, #tpu.memory_space<vmem>>, %arg9: memref<1x1xf32, #tpu.memory_space<vmem>>, %arg10: memref<1x1x256xf32, #tpu.memory_space<vmem>>) attributes {dimension_semantics = [#tpu.dimension_semantics<parallel>], iteration_bounds = array<i64: 1>, scalar_prefetch = 0 : i64, scratch_operands = 0 : i64, tpu.core_type = #tpu.core_type<tc>, window_params = [{transform_indices = @transform_0, window_bounds = array<i64: 256, 24>}, {transform_indices = @transform_1, window_bounds = array<i64: 256, 8>}, {pipeline_mode = #tpu.pipeline_mode<synchronous>, transform_indices = @transform_2, window_bounds = array<i64: 24, 128>}, {pipeline_mode = #tpu.pipeline_mode<synchronous>, transform_indices = @transform_3, window_bounds = array<i64: 8, 128>}, {pipeline_mode = #tpu.pipeline_mode<synchronous>, transform_indices = @transform_4, window_bounds = array<i64: 1, 128>}, {pipeline_mode = #tpu.pipeline_mode<synchronous>, transform_indices = @transform_5, window_bounds = array<i64: 128, 128>}, {pipeline_mode = #tpu.pipeline_mode<synchronous>, transform_indices = @transform_6, window_bounds = array<i64: 1, 128>}, {pipeline_mode = #tpu.pipeline_mode<synchronous>, transform_indices = @transform_7, window_bounds = array<i64: 8, 128>}, {pipeline_mode = #tpu.pipeline_mode<synchronous>, transform_indices = @transform_8, window_bounds = array<i64: 1, 1>}, {transform_indices = @transform_9, window_bounds = array<i64: 1, 1, 256>}]} {
    %c0 = arith.constant 0 : index
    %c0_0 = arith.constant 0 : index
    %0 = vector.load %arg1[%c0, %c0_0] : memref<256x24xf32, #tpu.memory_space<vmem>>, vector<256x24xf32>
    %1 = arith.truncf %0 : vector<256x24xf32> to vector<256x24xbf16>
    %c0_1 = arith.constant 0 : index
    %c0_2 = arith.constant 0 : index
    %2 = vector.load %arg3[%c0_1, %c0_2] : memref<24x128xbf16, #tpu.memory_space<vmem>>, vector<24x128xbf16>
    %cst = arith.constant dense<0.000000e+00> : vector<256x128xf32>
    %3 = tpu.matmul %1, %2, %cst {dimension_numbers = #tpu.dot_dimension_numbers<[1], [0], [0], [1], [0, 0, 1, 1], [], []>} : vector<256x24xbf16>, vector<24x128xbf16>, vector<256x128xf32> -> vector<256x128xf32>
    %c0_3 = arith.constant 0 : index
    %c0_4 = arith.constant 0 : index
    %4 = vector.load %arg2[%c0_3, %c0_4] : memref<256x8xf32, #tpu.memory_space<vmem>>, vector<256x8xf32>
    %5 = arith.truncf %4 : vector<256x8xf32> to vector<256x8xbf16>
    %c0_5 = arith.constant 0 : index
    %c0_6 = arith.constant 0 : index
    %6 = vector.load %arg4[%c0_5, %c0_6] : memref<8x128xbf16, #tpu.memory_space<vmem>>, vector<8x128xbf16>
    %cst_7 = arith.constant dense<0.000000e+00> : vector<256x128xf32>
    %7 = tpu.matmul %5, %6, %cst_7 {dimension_numbers = #tpu.dot_dimension_numbers<[1], [0], [0], [1], [0, 0, 1, 1], [], []>} : vector<256x8xbf16>, vector<8x128xbf16>, vector<256x128xf32> -> vector<256x128xf32>
    %8 = arith.addf %3, %7 : vector<256x128xf32>
    %c0_8 = arith.constant 0 : index
    %c0_9 = arith.constant 0 : index
    %9 = vector.load %arg5[%c0_8, %c0_9] : memref<1x128xf32, #tpu.memory_space<vmem>>, vector<1x128xf32>
    %10 = vector.broadcast %9 : vector<1x128xf32> to vector<256x128xf32>
    %11 = arith.addf %8, %10 : vector<256x128xf32>
    %cst_10 = arith.constant 0.000000e+00 : f32
    %12 = vector.broadcast %cst_10 : f32 to vector<256x128xf32>
    %13 = arith.maximumf %11, %12 : vector<256x128xf32>
    %14 = arith.truncf %13 : vector<256x128xf32> to vector<256x128xbf16>
    %c0_11 = arith.constant 0 : index
    %c0_12 = arith.constant 0 : index
    %15 = vector.load %arg6[%c0_11, %c0_12] : memref<128x128xbf16, #tpu.memory_space<vmem>>, vector<128x128xbf16>
    %cst_13 = arith.constant dense<0.000000e+00> : vector<256x128xf32>
    %16 = tpu.matmul %14, %15, %cst_13 {dimension_numbers = #tpu.dot_dimension_numbers<[1], [0], [0], [1], [0, 0, 1, 1], [], []>} : vector<256x128xbf16>, vector<128x128xbf16>, vector<256x128xf32> -> vector<256x128xf32>
    %c0_14 = arith.constant 0 : index
    %c0_15 = arith.constant 0 : index
    %17 = vector.load %arg7[%c0_14, %c0_15] : memref<1x128xf32, #tpu.memory_space<vmem>>, vector<1x128xf32>
    %18 = vector.broadcast %17 : vector<1x128xf32> to vector<256x128xf32>
    %19 = arith.addf %16, %18 : vector<256x128xf32>
    %cst_16 = arith.constant 0.000000e+00 : f32
    %20 = vector.broadcast %cst_16 : f32 to vector<256x128xf32>
    %21 = arith.maximumf %19, %20 : vector<256x128xf32>
    %c0_17 = arith.constant 0 : index
    %c0_18 = arith.constant 0 : index
    %22 = vector.load %arg8[%c0_17, %c0_18] : memref<8x128xbf16, #tpu.memory_space<vmem>>, vector<8x128xbf16>
    %23 = arith.truncf %21 : vector<256x128xf32> to vector<256x128xbf16>
    %cst_19 = arith.constant dense<0.000000e+00> : vector<8x256xf32>
    %24 = tpu.matmul %22, %23, %cst_19 {dimension_numbers = #tpu.dot_dimension_numbers<[1], [1], [0], [0], [0, 0, 1, 0], [], []>} : vector<8x128xbf16>, vector<256x128xbf16>, vector<8x256xf32> -> vector<8x256xf32>
    %25 = vector.extract_strided_slice %24 {offsets = [0, 0], sizes = [1, 256], strides = [1, 1]} : vector<8x256xf32> to vector<1x256xf32>
    %c0_20 = arith.constant 0 : index
    %c0_21 = arith.constant 0 : index
    %26 = vector.load %arg9[%c0_20, %c0_21] : memref<1x1xf32, #tpu.memory_space<vmem>>, vector<1x1xf32>
    %27 = vector.broadcast %26 : vector<1x1xf32> to vector<1x256xf32>
    %28 = arith.addf %25, %27 : vector<1x256xf32>
    %c0_22 = arith.constant 0 : index
    %c0_23 = arith.constant 0 : index
    %c0_24 = arith.constant 0 : index
    %29 = vector.load %arg10[%c0_22, %c0_23, %c0_24] : memref<1x1x256xf32, #tpu.memory_space<vmem>>, vector<1x1x256xf32>
    %30 = vector.shape_cast %29 : vector<1x1x256xf32> to vector<1x256xf32>
    %31 = vector.shape_cast %28 : vector<1x256xf32> to vector<1x1x256xf32>
    tpu.vector_store %arg10[%c0_22, %c0_23, %c0_24], %31 {strides = array<i32>} : memref<1x1x256xf32, #tpu.memory_space<vmem>>, vector<1x1x256xf32>,
    return
  }
  func.func @transform_0(%arg0: i32) -> (i32, i32) {
    %c0_i32 = arith.constant 0 : i32
    %c0_i32_0 = arith.constant 0 : i32
    return %arg0, %c0_i32 : i32, i32
  }
  func.func @transform_1(%arg0: i32) -> (i32, i32) {
    %c0_i32 = arith.constant 0 : i32
    %c0_i32_0 = arith.constant 0 : i32
    return %arg0, %c0_i32 : i32, i32
  }
  func.func @transform_2(%arg0: i32) -> (i32, i32) {
    %c0_i32 = arith.constant 0 : i32
    %c0_i32_0 = arith.constant 0 : i32
    %c0_i32_1 = arith.constant 0 : i32
    return %c0_i32, %c0_i32_0 : i32, i32
  }
  func.func @transform_3(%arg0: i32) -> (i32, i32) {
    %c0_i32 = arith.constant 0 : i32
    %c0_i32_0 = arith.constant 0 : i32
    %c0_i32_1 = arith.constant 0 : i32
    return %c0_i32, %c0_i32_0 : i32, i32
  }
  func.func @transform_4(%arg0: i32) -> (i32, i32) {
    %c0_i32 = arith.constant 0 : i32
    %c0_i32_0 = arith.constant 0 : i32
    %c0_i32_1 = arith.constant 0 : i32
    return %c0_i32, %c0_i32_0 : i32, i32
  }
  func.func @transform_5(%arg0: i32) -> (i32, i32) {
    %c0_i32 = arith.constant 0 : i32
    %c0_i32_0 = arith.constant 0 : i32
    %c0_i32_1 = arith.constant 0 : i32
    return %c0_i32, %c0_i32_0 : i32, i32
  }
  func.func @transform_6(%arg0: i32) -> (i32, i32) {
    %c0_i32 = arith.constant 0 : i32
    %c0_i32_0 = arith.constant 0 : i32
    %c0_i32_1 = arith.constant 0 : i32
    return %c0_i32, %c0_i32_0 : i32, i32
  }
  func.func @transform_7(%arg0: i32) -> (i32, i32) {
    %c0_i32 = arith.constant 0 : i32
    %c0_i32_0 = arith.constant 0 : i32
    %c0_i32_1 = arith.constant 0 : i32
    return %c0_i32, %c0_i32_0 : i32, i32
  }
  func.func @transform_8(%arg0: i32) -> (i32, i32) {
    %c0_i32 = arith.constant 0 : i32
    %c0_i32_0 = arith.constant 0 : i32
    %c0_i32_1 = arith.constant 0 : i32
    return %c0_i32, %c0_i32_0 : i32, i32
  }
  func.func @transform_9(%arg0: i32) -> (i32, i32, i32) {
    %c0_i32 = arith.constant 0 : i32
    %c0_i32_0 = arith.constant 0 : i32
    %c0_i32_1 = arith.constant 0 : i32
    return %arg0, %c0_i32, %c0_i32_0 : i32, i32, i32
  }
}

</mosaic_0001>

<llo_original>
// kernel: value_network_forward.1
$region0: #{value_network_forward.1}
  #allocation0 [shape = 'u32[]', space=smem, size = 0x4, offset = 0x4, fixed_abs, tag = 'smem constant byte address 0x4 - core index']
  #allocation1 [shape = 'u32[144,128]{1,0:T(1,128)}', space=vmem, size = 0x12000, scoped, tag = 'internal scratch']
  #allocation2 [shape = 'f32[1,1]{1,0:T(1,128)S(1)}', space=vmem, size = 0x200, scoped, tag = 'scoped memory for value_network_forward.1']
  %s0 = inlined_call_operand.vmem [shape: f32[200,24], index: 0, kind: input, shape index: {}]
  %s1 = inlined_call_operand.vmem [shape: f32[200,8], index: 1, kind: input, shape index: {}]
  %s2 = inlined_call_operand.vmem [shape: bf16[24,128], index: 2, kind: input, shape index: {}]
  %s3 = inlined_call_operand.vmem [shape: bf16[8,128], index: 3, kind: input, shape index: {}]
  %s4 = inlined_call_operand.vmem [shape: f32[1,128], index: 4, kind: input, shape index: {}]
  %s5 = inlined_call_operand.vmem [shape: bf16[128,128], index: 5, kind: input, shape index: {}]
  %s6 = inlined_call_operand.vmem [shape: f32[1,128], index: 6, kind: input, shape index: {}]
  %s7 = inlined_call_operand.vmem [shape: bf16[8,128], index: 7, kind: input, shape index: {}]
  %s8 = inlined_call_operand.<no memory space> [shape: f32[1,1], index: 8, kind: input, shape index: {}]
  %s9 = inlined_call_operand.vmem [shape: f32[1,1,256], index: 9, kind: output, shape index: {}]
  %s10 = sld [smem:[#allocation0]]
  $region46: #{value_network_forward.1} parent=0
    _
  %s12 = ssub.s32 1, %s10
  %s13 = scalar_select 0, %s12, %s10
  %v14 = vstv %s8
  %15 = vst [vmem:[#allocation2] sm:$0x1] %v14
  // Predicated region
  $region2: #{value_network_forward.1} parent=0 // pred_check
    _
  $region3: #{value_network_forward.1} parent=0 // pred_check_branch
    %17 = sbr.rel (0) target = $region5
  $region4: #{value_network_forward.1} parent=0 // pred_region
    _
  $region5: #{value_network_forward.1} parent=0 // pred_fallthru
    _
  // Predicated region
  $region6: #{value_network_forward.1} parent=0 // pred_check
    _
  $region7: #{value_network_forward.1} parent=0 // pred_check_branch
    %19 = sbr.rel (0) target = $region9
  $region8: #{value_network_forward.1} parent=0 // pred_region
    _
  $region9: #{value_network_forward.1} parent=0 // pred_fallthru
    _
  // Predicated region
  $region10: #{value_network_forward.1} parent=0 // pred_check
    _
  $region11: #{value_network_forward.1} parent=0 // pred_check_branch
    %21 = sbr.rel (0) target = $region13
  $region12: #{value_network_forward.1} parent=0 // pred_region
    _
  $region13: #{value_network_forward.1} parent=0 // pred_fallthru
    _
  // Predicated region
  $region14: #{value_network_forward.1} parent=0 // pred_check
    _
  $region15: #{value_network_forward.1} parent=0 // pred_check_branch
    %23 = sbr.rel (0) target = $region17
  $region16: #{value_network_forward.1} parent=0 // pred_region
    _
  $region17: #{value_network_forward.1} parent=0 // pred_fallthru
    _
  // Predicated region
  $region18: #{value_network_forward.1} parent=0 // pred_check
    _
  $region19: #{value_network_forward.1} parent=0 // pred_check_branch
    %25 = sbr.rel (0) target = $region21
  $region20: #{value_network_forward.1} parent=0 // pred_region
    _
  $region21: #{value_network_forward.1} parent=0 // pred_fallthru
    _
  // Predicated region
  $region22: #{value_network_forward.1} parent=0 // pred_check
    _
  $region23: #{value_network_forward.1} parent=0 // pred_check_branch
    %27 = sbr.rel (0) target = $region25
  $region24: #{value_network_forward.1} parent=0 // pred_region
    _
  $region25: #{value_network_forward.1} parent=0 // pred_fallthru
    _
  // Predicated region
  $region26: #{value_network_forward.1} parent=0 // pred_check
    _
  $region27: #{value_network_forward.1} parent=0 // pred_check_branch
    %29 = sbr.rel (0) target = $region29
  $region28: #{value_network_forward.1} parent=0 // pred_region
    _
  $region29: #{value_network_forward.1} parent=0 // pred_fallthru
    _
  // Predicated region
  $region30: #{value_network_forward.1} parent=0 // pred_check
    _
  $region31: #{value_network_forward.1} parent=0 // pred_check_branch
    %31 = sbr.rel (0) target = $region33
  $region32: #{value_network_forward.1} parent=0 // pred_region
    _
  $region33: #{value_network_forward.1} parent=0 // pred_fallthru
    _
  // Predicated region
  $region34: #{value_network_forward.1} parent=0 // pred_check
    _
  $region35: #{value_network_forward.1} parent=0 // pred_check_branch
    %33 = sbr.rel (0) target = $region37
  $region36: #{value_network_forward.1} parent=0 // pred_region
    _
  $region37: #{value_network_forward.1} parent=0 // pred_fallthru
    _
  %v35 = vld [vmem:[%s0] sm:$0xff]
  %v36 = vld [vmem:[%s0 + $0x8] sm:$0xff]
  %v37 = vld [vmem:[%s0 + $0x10] sm:$0xff]
  %v38 = vld [vmem:[%s0 + $0x18] sm:$0xff]
  %v39 = vld [vmem:[%s0 + $0x20] sm:$0xff]
  %v40 = vld [vmem:[%s0 + $0x28] sm:$0xff]
  %v41 = vld [vmem:[%s0 + $0x30] sm:$0xff]
  %v42 = vld [vmem:[%s0 + $0x38] sm:$0xff]
  %v43 = vld [vmem:[%s0 + $0x40] sm:$0xff]
  %v44 = vld [vmem:[%s0 + $0x48] sm:$0xff]
  %v45 = vld [vmem:[%s0 + $0x50] sm:$0xff]
  %v46 = vld [vmem:[%s0 + $0x58] sm:$0xff]
  %v47 = vld [vmem:[%s0 + $0x60] sm:$0xff]
  %v48 = vld [vmem:[%s0 + $0x68] sm:$0xff]
  %v49 = vld [vmem:[%s0 + $0x70] sm:$0xff]
  %v50 = vld [vmem:[%s0 + $0x78] sm:$0xff]
  %v51 = vld [vmem:[%s0 + $0x80] sm:$0xff]
  %v52 = vld [vmem:[%s0 + $0x88] sm:$0xff]
  %v53 = vld [vmem:[%s0 + $0x90] sm:$0xff]
  %v54 = vld [vmem:[%s0 + $0x98] sm:$0xff]
  %v55 = vld [vmem:[%s0 + $0xa0] sm:$0xff]
  %v56 = vld [vmem:[%s0 + $0xa8] sm:$0xff]
  %v57 = vld [vmem:[%s0 + $0xb0] sm:$0xff]
  %v58 = vld [vmem:[%s0 + $0xb8] sm:$0xff]
  %v59 = vld [vmem:[%s0 + $0xc0] sm:$0xff]
  %v60 = vld [vmem:[%s0 + $0xc8] sm:$0xff]
  %v61 = vld [vmem:[%s0 + $0xd0] sm:$0xff]
  %v62 = vld [vmem:[%s0 + $0xd8] sm:$0xff]
  %v63 = vld [vmem:[%s0 + $0xe0] sm:$0xff]
  %v64 = vld [vmem:[%s0 + $0xe8] sm:$0xff]
  %v65 = vld [vmem:[%s0 + $0xf0] sm:$0xff]
  %v66 = vld [vmem:[%s0 + $0xf8] sm:$0xff]
  %v67 = vpack.c.bf16 %v36, %v35
  %v68 = vpack.c.bf16 %v38, %v37
  %v69 = vpack.c.bf16 %v40, %v39
  %v70 = vpack.c.bf16 %v42, %v41
  %v71 = vpack.c.bf16 %v44, %v43
  %v72 = vpack.c.bf16 %v46, %v45
  %v73 = vpack.c.bf16 %v48, %v47
  %v74 = vpack.c.bf16 %v50, %v49
  %v75 = vpack.c.bf16 %v52, %v51
  %v76 = vpack.c.bf16 %v54, %v53
  %v77 = vpack.c.bf16 %v56, %v55
  %v78 = vpack.c.bf16 %v58, %v57
  %v79 = vpack.c.bf16 %v60, %v59
  %v80 = vpack.c.bf16 %v62, %v61
  %v81 = vpack.c.bf16 %v64, %v63
  %v82 = vpack.c.bf16 %v66, %v65
  %v83 = vld [vmem:[%s2] sm:$0xf]
  %v84 = vld [vmem:[%s2 + $0x4] sm:$0xf]
  %v85 = vld [vmem:[%s2 + $0x8] sm:$0xf]
  %v86 = vld [vmem:[%s1] sm:$0xff]
  %v87 = vld [vmem:[%s1 + $0x8] sm:$0xff]
  %v88 = vld [vmem:[%s1 + $0x10] sm:$0xff]
  %v89 = vld [vmem:[%s1 + $0x18] sm:$0xff]
  %v90 = vld [vmem:[%s1 + $0x20] sm:$0xff]
  %v91 = vld [vmem:[%s1 + $0x28] sm:$0xff]
  %v92 = vld [vmem:[%s1 + $0x30] sm:$0xff]
  %v93 = vld [vmem:[%s1 + $0x38] sm:$0xff]
  %v94 = vld [vmem:[%s1 + $0x40] sm:$0xff]
  %v95 = vld [vmem:[%s1 + $0x48] sm:$0xff]
  %v96 = vld [vmem:[%s1 + $0x50] sm:$0xff]
  %v97 = vld [vmem:[%s1 + $0x58] sm:$0xff]
  %v98 = vld [vmem:[%s1 + $0x60] sm:$0xff]
  %v99 = vld [vmem:[%s1 + $0x68] sm:$0xff]
  %v100 = vld [vmem:[%s1 + $0x70] sm:$0xff]
  %v101 = vld [vmem:[%s1 + $0x78] sm:$0xff]
  %v102 = vld [vmem:[%s1 + $0x80] sm:$0xff]
  %v103 = vld [vmem:[%s1 + $0x88] sm:$0xff]
  %v104 = vld [vmem:[%s1 + $0x90] sm:$0xff]
  %v105 = vld [vmem:[%s1 + $0x98] sm:$0xff]
  %v106 = vld [vmem:[%s1 + $0xa0] sm:$0xff]
  %v107 = vld [vmem:[%s1 + $0xa8] sm:$0xff]
  %v108 = vld [vmem:[%s1 + $0xb0] sm:$0xff]
  %v109 = vld [vmem:[%s1 + $0xb8] sm:$0xff]
  %v110 = vld [vmem:[%s1 + $0xc0] sm:$0xff]
  %v111 = vld [vmem:[%s1 + $0xc8] sm:$0xff]
  %v112 = vld [vmem:[%s1 + $0xd0] sm:$0xff]
  %v113 = vld [vmem:[%s1 + $0xd8] sm:$0xff]
  %v114 = vld [vmem:[%s1 + $0xe0] sm:$0xff]
  %v115 = vld [vmem:[%s1 + $0xe8] sm:$0xff]
  %v116 = vld [vmem:[%s1 + $0xf0] sm:$0xff]
  %v117 = vld [vmem:[%s1 + $0xf8] sm:$0xff]
  %v118 = vpack.c.bf16 %v87, %v86
  %v119 = vpack.c.bf16 %v89, %v88
  %v120 = vpack.c.bf16 %v91, %v90
  %v121 = vpack.c.bf16 %v93, %v92
  %v122 = vpack.c.bf16 %v95, %v94
  %v123 = vpack.c.bf16 %v97, %v96
  %v124 = vpack.c.bf16 %v99, %v98
  %v125 = vpack.c.bf16 %v101, %v100
  %v126 = vpack.c.bf16 %v103, %v102
  %v127 = vpack.c.bf16 %v105, %v104
  %v128 = vpack.c.bf16 %v107, %v106
  %v129 = vpack.c.bf16 %v109, %v108
  %v130 = vpack.c.bf16 %v111, %v110
  %v131 = vpack.c.bf16 %v113, %v112
  %v132 = vpack.c.bf16 %v115, %v114
  %v133 = vpack.c.bf16 %v117, %v116
  %v134 = vld [vmem:[%s3] sm:$0xf]
  %vm135 = vcmask 64512
  %v137 = vsel %vm135, %v118, 0
  %v140 = vsel %vm135, %v119, 0
  %v143 = vsel %vm135, %v120, 0
  %v146 = vsel %vm135, %v121, 0
  %v149 = vsel %vm135, %v122, 0
  %v152 = vsel %vm135, %v123, 0
  %v155 = vsel %vm135, %v124, 0
  %v158 = vsel %vm135, %v125, 0
  %v161 = vsel %vm135, %v126, 0
  %v164 = vsel %vm135, %v127, 0
  %v167 = vsel %vm135, %v128, 0
  %v170 = vsel %vm135, %v129, 0
  %v173 = vsel %vm135, %v130, 0
  %v176 = vsel %vm135, %v131, 0
  %v179 = vsel %vm135, %v132, 0
  %v182 = vsel %vm135, %v133, 0
  %vm184 = vcmask 1043456
  %v186 = vsel %vm184, %v134, 0
  %188 = vmatprep.subr.bf16.mxu0 0
  %189 = vmatpush1.bf16.msra.mxu0 0
  %190 = vmatprep.subr.bf16.mxu0 0
  %191 = vmatpush1.bf16.msra.mxu0 0
  %192 = vmatprep.subr.bf16.mxu0 0
  %193 = vmatpush1.bf16.msra.mxu0 0
  %194 = vmatprep.subr.bf16.mxu0 0
  %195 = vmatpush1.bf16.msra.mxu0 0
  %196 = vmatprep.subr.bf16.mxu0 0
  %197 = vmatpush1.bf16.msra.mxu0 0
  %198 = vmatprep.subr.bf16.mxu0 0
  %199 = vmatpush1.bf16.msra.mxu0 0
  %200 = vmatprep.subr.bf16.mxu0 0
  %201 = vmatpush1.bf16.msra.mxu0 0
  %202 = vmatprep.subr.bf16.mxu0 0
  %203 = vmatpush1.bf16.msra.mxu0 %v186
  %204 = vmatprep.subr.bf16.mxu0 0
  %205 = vmatpush2.bf16.msra.mxu0 0
  %206 = vmatprep.subr.bf16.mxu0 0
  %207 = vmatpush2.bf16.msra.mxu0 0
  %208 = vmatprep.subr.bf16.mxu0 0
  %209 = vmatpush2.bf16.msra.mxu0 0
  %210 = vmatprep.subr.bf16.mxu0 0
  %211 = vmatpush2.bf16.msra.mxu0 0
  %212 = vmatprep.subr.bf16.mxu0 0
  %213 = vmatpush2.bf16.msra.mxu0 0
  %214 = vmatprep.subr.bf16.mxu0 0
  %215 = vmatpush2.bf16.msra.mxu0 0
  %216 = vmatprep.subr.bf16.mxu0 0
  %217 = vmatpush2.bf16.msra.mxu0 0
  %218 = vmatprep.subr.bf16.mxu0 0
  %219 = vmatpush2.bf16.msra.mxu0 0
  %220 = vmatprep.mubr.bf16.mxu0 0
  %221 = vmatmul.mubr.bf16.gmra.mxu0 %v137
  %v222 = vpop.f32.mrf.mxu0
  %v223 = vadd.f32 0.0, %v222
  %v224 = vpop.f32.mrf.mxu0
  %v225 = vpop.f32.mrf.mxu0
  %v226 = vadd.f32 0.0, %v225
  %v227 = vpop.f32.mrf.mxu0
  %228 = vmatprep.mubr.bf16.mxu0 0
  %229 = vmatmul.mubr.bf16.gmra.mxu0 %v140
  %v230 = vpop.f32.mrf.mxu0
  %v231 = vadd.f32 0.0, %v230
  %v232 = vpop.f32.mrf.mxu0
  %v233 = vpop.f32.mrf.mxu0
  %v234 = vadd.f32 0.0, %v233
  %v235 = vpop.f32.mrf.mxu0
  %236 = vmatprep.mubr.bf16.mxu0 0
  %237 = vmatmul.mubr.bf16.gmra.mxu0 %v143
  %v238 = vpop.f32.mrf.mxu0
  %v239 = vadd.f32 0.0, %v238
  %v240 = vpop.f32.mrf.mxu0
  %v241 = vpop.f32.mrf.mxu0
  %v242 = vadd.f32 0.0, %v241
  %v243 = vpop.f32.mrf.mxu0
  %244 = vmatprep.mubr.bf16.mxu0 0
  %245 = vmatmul.mubr.bf16.gmra.mxu0 %v146
  %v246 = vpop.f32.mrf.mxu0
  %v247 = vadd.f32 0.0, %v246
  %v248 = vpop.f32.mrf.mxu0
  %v249 = vpop.f32.mrf.mxu0
  %v250 = vadd.f32 0.0, %v249
  %v251 = vpop.f32.mrf.mxu0
  %252 = vmatprep.mubr.bf16.mxu0 0
  %253 = vmatmul.mubr.bf16.gmra.mxu0 %v149
  %v254 = vpop.f32.mrf.mxu0
  %v255 = vadd.f32 0.0, %v254
  %v256 = vpop.f32.mrf.mxu0
  %v257 = vpop.f32.mrf.mxu0
  %v258 = vadd.f32 0.0, %v257
  %v259 = vpop.f32.mrf.mxu0
  %260 = vmatprep.mubr.bf16.mxu0 0
  %261 = vmatmul.mubr.bf16.gmra.mxu0 %v152
  %v262 = vpop.f32.mrf.mxu0
  %v263 = vadd.f32 0.0, %v262
  %v264 = vpop.f32.mrf.mxu0
  %v265 = vpop.f32.mrf.mxu0
  %v266 = vadd.f32 0.0, %v265
  %v267 = vpop.f32.mrf.mxu0
  %268 = vmatprep.mubr.bf16.mxu0 0
  %269 = vmatmul.mubr.bf16.gmra.mxu0 %v155
  %v270 = vpop.f32.mrf.mxu0
  %v271 = vadd.f32 0.0, %v270
  %v272 = vpop.f32.mrf.mxu0
  %v273 = vpop.f32.mrf.mxu0
  %v274 = vadd.f32 0.0, %v273
  %v275 = vpop.f32.mrf.mxu0
  %276 = vmatprep.mubr.bf16.mxu0 0
  %277 = vmatmul.mubr.bf16.gmra.mxu0 %v158
  %v278 = vpop.f32.mrf.mxu0
  %v279 = vadd.f32 0.0, %v278
  %v280 = vpop.f32.mrf.mxu0
  %v281 = vpop.f32.mrf.mxu0
  %v282 = vadd.f32 0.0, %v281
  %v283 = vpop.f32.mrf.mxu0
  %284 = vmatprep.mubr.bf16.mxu0 0
  %285 = vmatmul.mubr.bf16.gmra.mxu0 %v161
  %v286 = vpop.f32.mrf.mxu0
  %v287 = vadd.f32 0.0, %v286
  %v288 = vpop.f32.mrf.mxu0
  %v289 = vpop.f32.mrf.mxu0
  %v290 = vadd.f32 0.0, %v289
  %v291 = vpop.f32.mrf.mxu0
  %292 = vmatprep.mubr.bf16.mxu0 0
  %293 = vmatmul.mubr.bf16.gmra.mxu0 %v164
  %v294 = vpop.f32.mrf.mxu0
  %v295 = vadd.f32 0.0, %v294
  %v296 = vpop.f32.mrf.mxu0
  %v297 = vpop.f32.mrf.mxu0
  %v298 = vadd.f32 0.0, %v297
  %v299 = vpop.f32.mrf.mxu0
  %300 = vmatprep.mubr.bf16.mxu0 0
  %301 = vmatmul.mubr.bf16.gmra.mxu0 %v167
  %v302 = vpop.f32.mrf.mxu0
  %v303 = vadd.f32 0.0, %v302
  %v304 = vpop.f32.mrf.mxu0
  %v305 = vpop.f32.mrf.mxu0
  %v306 = vadd.f32 0.0, %v305
  %v307 = vpop.f32.mrf.mxu0
  %308 = vmatprep.mubr.bf16.mxu0 0
  %309 = vmatmul.mubr.bf16.gmra.mxu0 %v170
  %v310 = vpop.f32.mrf.mxu0
  %v311 = vadd.f32 0.0, %v310
  %v312 = vpop.f32.mrf.mxu0
  %v313 = vpop.f32.mrf.mxu0
  %v314 = vadd.f32 0.0, %v313
  %v315 = vpop.f32.mrf.mxu0
  %316 = vmatprep.mubr.bf16.mxu0 0
  %317 = vmatmul.mubr.bf16.gmra.mxu0 %v173
  %v318 = vpop.f32.mrf.mxu0
  %v319 = vadd.f32 0.0, %v318
  %v320 = vpop.f32.mrf.mxu0
  %v321 = vpop.f32.mrf.mxu0
  %v322 = vadd.f32 0.0, %v321
  %v323 = vpop.f32.mrf.mxu0
  %324 = vmatprep.mubr.bf16.mxu0 0
  %325 = vmatmul.mubr.bf16.gmra.mxu0 %v176
  %v326 = vpop.f32.mrf.mxu0
  %v327 = vadd.f32 0.0, %v326
  %v328 = vpop.f32.mrf.mxu0
  %v329 = vpop.f32.mrf.mxu0
  %v330 = vadd.f32 0.0, %v329
  %v331 = vpop.f32.mrf.mxu0
  %332 = vmatprep.mubr.bf16.mxu0 0
  %333 = vmatmul.mubr.bf16.gmra.mxu0 %v179
  %v334 = vpop.f32.mrf.mxu0
  %v335 = vadd.f32 0.0, %v334
  %v336 = vpop.f32.mrf.mxu0
  %v337 = vpop.f32.mrf.mxu0
  %v338 = vadd.f32 0.0, %v337
  %v339 = vpop.f32.mrf.mxu0
  %340 = vmatprep.mubr.bf16.mxu0 0
  %341 = vmatmul.mubr.bf16.gmra.mxu0 %v182
  %v342 = vpop.f32.mrf.mxu0
  %v343 = vadd.f32 0.0, %v342
  %v344 = vpop.f32.mrf.mxu0
  %v345 = vpop.f32.mrf.mxu0
  %v346 = vadd.f32 0.0, %v345
  %v347 = vpop.f32.mrf.mxu0
  %348 = vdwg.mxu0
  %v352 = vunpack.c.l.b16 %v83
  %v353 = vunpack.c.l.b16 %v84
  %v354 = vunpack.c.l.b16 %v85
  %v355 = vpack.c.b16 %v353, %v352
  %v356 = vpack.c.b16 %v354, %v354
  %vm358 = vcmask 195584
  %v360 = vsel %vm358, %v67, 0
  %v363 = vsel %vm358, %v68, 0
  %v366 = vsel %vm358, %v69, 0
  %v369 = vsel %vm358, %v70, 0
  %v372 = vsel %vm358, %v71, 0
  %v375 = vsel %vm358, %v72, 0
  %v378 = vsel %vm358, %v73, 0
  %v381 = vsel %vm358, %v74, 0
  %v384 = vsel %vm358, %v75, 0
  %v387 = vsel %vm358, %v76, 0
  %v390 = vsel %vm358, %v77, 0
  %v393 = vsel %vm358, %v78, 0
  %v396 = vsel %vm358, %v79, 0
  %v399 = vsel %vm358, %v80, 0
  %v402 = vsel %vm358, %v81, 0
  %v405 = vsel %vm358, %v82, 0
  %v408 = vsel %vm184, %v356, 0
  %410 = vmatprep.subr.bf16.mxu0 0
  %411 = vmatpush1.bf16.msra.mxu0 0
  %412 = vmatprep.subr.bf16.mxu0 0
  %413 = vmatpush1.bf16.msra.mxu0 0
  %414 = vmatprep.subr.bf16.mxu0 0
  %415 = vmatpush1.bf16.msra.mxu0 0
  %416 = vmatprep.subr.bf16.mxu0 0
  %417 = vmatpush1.bf16.msra.mxu0 0
  %418 = vmatprep.subr.bf16.mxu0 0
  %419 = vmatpush1.bf16.msra.mxu0 0
  %420 = vmatprep.subr.bf16.mxu0 0
  %421 = vmatpush1.bf16.msra.mxu0 0
  %422 = vmatprep.subr.bf16.mxu0 0
  %423 = vmatpush1.bf16.msra.mxu0 %v408
  %424 = vmatprep.subr.bf16.mxu0 0
  %425 = vmatpush1.bf16.msra.mxu0 %v355
  %426 = vmatprep.subr.bf16.mxu0 0
  %427 = vmatpush2.bf16.msra.mxu0 0
  %428 = vmatprep.subr.bf16.mxu0 0
  %429 = vmatpush2.bf16.msra.mxu0 0
  %430 = vmatprep.subr.bf16.mxu0 0
  %431 = vmatpush2.bf16.msra.mxu0 0
  %432 = vmatprep.subr.bf16.mxu0 0
  %433 = vmatpush2.bf16.msra.mxu0 0
  %434 = vmatprep.subr.bf16.mxu0 0
  %435 = vmatpush2.bf16.msra.mxu0 0
  %436 = vmatprep.subr.bf16.mxu0 0
  %437 = vmatpush2.bf16.msra.mxu0 0
  %438 = vmatprep.subr.bf16.mxu0 0
  %439 = vmatpush2.bf16.msra.mxu0 0
  %440 = vmatprep.subr.bf16.mxu0 0
  %441 = vmatpush2.bf16.msra.mxu0 0
  %442 = vmatprep.mubr.bf16.mxu0 0
  %443 = vmatmul.mubr.bf16.gmra.mxu0 %v360
  %v444 = vpop.f32.mrf.mxu0
  %v445 = vadd.f32 %v223, %v444
  %v446 = vpop.f32.mrf.mxu0
  %v447 = vpop.f32.mrf.mxu0
  %v448 = vadd.f32 %v226, %v447
  %v449 = vpop.f32.mrf.mxu0
  %450 = vmatprep.mubr.bf16.mxu0 0
  %451 = vmatmul.mubr.bf16.gmra.mxu0 %v363
  %v452 = vpop.f32.mrf.mxu0
  %v453 = vadd.f32 %v231, %v452
  %v454 = vpop.f32.mrf.mxu0
  %v455 = vpop.f32.mrf.mxu0
  %v456 = vadd.f32 %v234, %v455
  %v457 = vpop.f32.mrf.mxu0
  %458 = vmatprep.mubr.bf16.mxu0 0
  %459 = vmatmul.mubr.bf16.gmra.mxu0 %v366
  %v460 = vpop.f32.mrf.mxu0
  %v461 = vadd.f32 %v239, %v460
  %v462 = vpop.f32.mrf.mxu0
  %v463 = vpop.f32.mrf.mxu0
  %v464 = vadd.f32 %v242, %v463
  %v465 = vpop.f32.mrf.mxu0
  %466 = vmatprep.mubr.bf16.mxu0 0
  %467 = vmatmul.mubr.bf16.gmra.mxu0 %v369
  %v468 = vpop.f32.mrf.mxu0
  %v469 = vadd.f32 %v247, %v468
  %v470 = vpop.f32.mrf.mxu0
  %v471 = vpop.f32.mrf.mxu0
  %v472 = vadd.f32 %v250, %v471
  %v473 = vpop.f32.mrf.mxu0
  %474 = vmatprep.mubr.bf16.mxu0 0
  %475 = vmatmul.mubr.bf16.gmra.mxu0 %v372
  %v476 = vpop.f32.mrf.mxu0
  %v477 = vadd.f32 %v255, %v476
  %v478 = vpop.f32.mrf.mxu0
  %v479 = vpop.f32.mrf.mxu0
  %v480 = vadd.f32 %v258, %v479
  %v481 = vpop.f32.mrf.mxu0
  %482 = vmatprep.mubr.bf16.mxu0 0
  %483 = vmatmul.mubr.bf16.gmra.mxu0 %v375
  %v484 = vpop.f32.mrf.mxu0
  %v485 = vadd.f32 %v263, %v484
  %v486 = vpop.f32.mrf.mxu0
  %v487 = vpop.f32.mrf.mxu0
  %v488 = vadd.f32 %v266, %v487
  %v489 = vpop.f32.mrf.mxu0
  %490 = vmatprep.mubr.bf16.mxu0 0
  %491 = vmatmul.mubr.bf16.gmra.mxu0 %v378
  %v492 = vpop.f32.mrf.mxu0
  %v493 = vadd.f32 %v271, %v492
  %v494 = vpop.f32.mrf.mxu0
  %v495 = vpop.f32.mrf.mxu0
  %v496 = vadd.f32 %v274, %v495
  %v497 = vpop.f32.mrf.mxu0
  %498 = vmatprep.mubr.bf16.mxu0 0
  %499 = vmatmul.mubr.bf16.gmra.mxu0 %v381
  %v500 = vpop.f32.mrf.mxu0
  %v501 = vadd.f32 %v279, %v500
  %v502 = vpop.f32.mrf.mxu0
  %v503 = vpop.f32.mrf.mxu0
  %v504 = vadd.f32 %v282, %v503
  %v505 = vpop.f32.mrf.mxu0
  %506 = vmatprep.mubr.bf16.mxu0 0
  %507 = vmatmul.mubr.bf16.gmra.mxu0 %v384
  %v508 = vpop.f32.mrf.mxu0
  %v509 = vadd.f32 %v287, %v508
  %v510 = vpop.f32.mrf.mxu0
  %v511 = vpop.f32.mrf.mxu0
  %v512 = vadd.f32 %v290, %v511
  %v513 = vpop.f32.mrf.mxu0
  %514 = vmatprep.mubr.bf16.mxu0 0
  %515 = vmatmul.mubr.bf16.gmra.mxu0 %v387
  %v516 = vpop.f32.mrf.mxu0
  %v517 = vadd.f32 %v295, %v516
  %v518 = vpop.f32.mrf.mxu0
  %v519 = vpop.f32.mrf.mxu0
  %v520 = vadd.f32 %v298, %v519
  %v521 = vpop.f32.mrf.mxu0
  %522 = vmatprep.mubr.bf16.mxu0 0
  %523 = vmatmul.mubr.bf16.gmra.mxu0 %v390
  %v524 = vpop.f32.mrf.mxu0
  %v525 = vadd.f32 %v303, %v524
  %v526 = vpop.f32.mrf.mxu0
  %v527 = vpop.f32.mrf.mxu0
  %v528 = vadd.f32 %v306, %v527
  %v529 = vpop.f32.mrf.mxu0
  %530 = vmatprep.mubr.bf16.mxu0 0
  %531 = vmatmul.mubr.bf16.gmra.mxu0 %v393
  %v532 = vpop.f32.mrf.mxu0
  %v533 = vadd.f32 %v311, %v532
  %v534 = vpop.f32.mrf.mxu0
  %v535 = vpop.f32.mrf.mxu0
  %v536 = vadd.f32 %v314, %v535
  %v537 = vpop.f32.mrf.mxu0
  %538 = vmatprep.mubr.bf16.mxu0 0
  %539 = vmatmul.mubr.bf16.gmra.mxu0 %v396
  %v540 = vpop.f32.mrf.mxu0
  %v541 = vadd.f32 %v319, %v540
  %v542 = vpop.f32.mrf.mxu0
  %v543 = vpop.f32.mrf.mxu0
  %v544 = vadd.f32 %v322, %v543
  %v545 = vpop.f32.mrf.mxu0
  %546 = vmatprep.mubr.bf16.mxu0 0
  %547 = vmatmul.mubr.bf16.gmra.mxu0 %v399
  %v548 = vpop.f32.mrf.mxu0
  %v549 = vadd.f32 %v327, %v548
  %v550 = vpop.f32.mrf.mxu0
  %v551 = vpop.f32.mrf.mxu0
  %v552 = vadd.f32 %v330, %v551
  %v553 = vpop.f32.mrf.mxu0
  %554 = vmatprep.mubr.bf16.mxu0 0
  %555 = vmatmul.mubr.bf16.gmra.mxu0 %v402
  %v556 = vpop.f32.mrf.mxu0
  %v557 = vadd.f32 %v335, %v556
  %v558 = vpop.f32.mrf.mxu0
  %v559 = vpop.f32.mrf.mxu0
  %v560 = vadd.f32 %v338, %v559
  %v561 = vpop.f32.mrf.mxu0
  %562 = vmatprep.mubr.bf16.mxu0 0
  %563 = vmatmul.mubr.bf16.gmra.mxu0 %v405
  %v564 = vpop.f32.mrf.mxu0
  %v565 = vadd.f32 %v343, %v564
  %v566 = vpop.f32.mrf.mxu0
  %v567 = vpop.f32.mrf.mxu0
  %v568 = vadd.f32 %v346, %v567
  %v569 = vpop.f32.mrf.mxu0
  %570 = vdwg.mxu0
  %v571 = vld [vmem:[%s4] sm:$0x1]
  %v573 = vlaneseq
  %v574 = vshrl.u32 %v573, 7
  %v575 = vsub.s32 0, %v574
  %v576 = vrot.slane %v571, %v575
  %v578 = vadd.f32 %v445, %v576
  %v579 = vadd.f32 %v448, %v576
  %v580 = vadd.f32 %v453, %v576
  %v581 = vadd.f32 %v456, %v576
  %v582 = vadd.f32 %v461, %v576
  %v583 = vadd.f32 %v464, %v576
  %v584 = vadd.f32 %v469, %v576
  %v585 = vadd.f32 %v472, %v576
  %v586 = vadd.f32 %v477, %v576
  %v587 = vadd.f32 %v480, %v576
  %v588 = vadd.f32 %v485, %v576
  %v589 = vadd.f32 %v488, %v576
  %v590 = vadd.f32 %v493, %v576
  %v591 = vadd.f32 %v496, %v576
  %v592 = vadd.f32 %v501, %v576
  %v593 = vadd.f32 %v504, %v576
  %v594 = vadd.f32 %v509, %v576
  %v595 = vadd.f32 %v512, %v576
  %v596 = vadd.f32 %v517, %v576
  %v597 = vadd.f32 %v520, %v576
  %v598 = vadd.f32 %v525, %v576
  %v599 = vadd.f32 %v528, %v576
  %v600 = vadd.f32 %v533, %v576
  %v601 = vadd.f32 %v536, %v576
  %v602 = vadd.f32 %v541, %v576
  %v603 = vadd.f32 %v544, %v576
  %v604 = vadd.f32 %v549, %v576
  %v605 = vadd.f32 %v552, %v576
  %v606 = vadd.f32 %v557, %v576
  %v607 = vadd.f32 %v560, %v576
  %v608 = vadd.f32 %v565, %v576
  %v609 = vadd.f32 %v568, %v576
  %v610 = vmax.f32 %v578, 0.0
  %v611 = vmax.f32 %v579, 0.0
  %v612 = vmax.f32 %v580, 0.0
  %v613 = vmax.f32 %v581, 0.0
  %v614 = vmax.f32 %v582, 0.0
  %v615 = vmax.f32 %v583, 0.0
  %v616 = vmax.f32 %v584, 0.0
  %v617 = vmax.f32 %v585, 0.0
  %v618 = vmax.f32 %v586, 0.0
  %v619 = vmax.f32 %v587, 0.0
  %v620 = vmax.f32 %v588, 0.0
  %v621 = vmax.f32 %v589, 0.0
  %v622 = vmax.f32 %v590, 0.0
  %v623 = vmax.f32 %v591, 0.0
  %v624 = vmax.f32 %v592, 0.0
  %v625 = vmax.f32 %v593, 0.0
  %v626 = vmax.f32 %v594, 0.0
  %v627 = vmax.f32 %v595, 0.0
  %v628 = vmax.f32 %v596, 0.0
  %v629 = vmax.f32 %v597, 0.0
  %v630 = vmax.f32 %v598, 0.0
  %v631 = vmax.f32 %v599, 0.0
  %v632 = vmax.f32 %v600, 0.0
  %v633 = vmax.f32 %v601, 0.0
  %v634 = vmax.f32 %v602, 0.0
  %v635 = vmax.f32 %v603, 0.0
  %v636 = vmax.f32 %v604, 0.0
  %v637 = vmax.f32 %v605, 0.0
  %v638 = vmax.f32 %v606, 0.0
  %v639 = vmax.f32 %v607, 0.0
  %v640 = vmax.f32 %v608, 0.0
  %v641 = vmax.f32 %v609, 0.0
  %v642 = vpack.c.bf16 %v611, %v610
  %v643 = vpack.c.bf16 %v613, %v612
  %v644 = vpack.c.bf16 %v615, %v614
  %v645 = vpack.c.bf16 %v617, %v616
  %v646 = vpack.c.bf16 %v619, %v618
  %v647 = vpack.c.bf16 %v621, %v620
  %v648 = vpack.c.bf16 %v623, %v622
  %v649 = vpack.c.bf16 %v625, %v624
  %v650 = vpack.c.bf16 %v627, %v626
  %v651 = vpack.c.bf16 %v629, %v628
  %v652 = vpack.c.bf16 %v631, %v630
  %v653 = vpack.c.bf16 %v633, %v632
  %v654 = vpack.c.bf16 %v635, %v634
  %v655 = vpack.c.bf16 %v637, %v636
  %v656 = vpack.c.bf16 %v639, %v638
  %v657 = vpack.c.bf16 %v641, %v640
  %v658 = vld [vmem:[%s5] sm:$0xf]
  %v659 = vld [vmem:[%s5 + $0x4] sm:$0xf]
  %v660 = vld [vmem:[%s5 + $0x8] sm:$0xf]
  %v661 = vld [vmem:[%s5 + $0xc] sm:$0xf]
  %v662 = vld [vmem:[%s5 + $0x10] sm:$0xf]
  %v663 = vld [vmem:[%s5 + $0x14] sm:$0xf]
  %v664 = vld [vmem:[%s5 + $0x18] sm:$0xf]
  %v665 = vld [vmem:[%s5 + $0x1c] sm:$0xf]
  %v666 = vld [vmem:[%s5 + $0x20] sm:$0xf]
  %v667 = vld [vmem:[%s5 + $0x24] sm:$0xf]
  %v668 = vld [vmem:[%s5 + $0x28] sm:$0xf]
  %v669 = vld [vmem:[%s5 + $0x2c] sm:$0xf]
  %v670 = vld [vmem:[%s5 + $0x30] sm:$0xf]
  %v671 = vld [vmem:[%s5 + $0x34] sm:$0xf]
  %v672 = vld [vmem:[%s5 + $0x38] sm:$0xf]
  %v673 = vld [vmem:[%s5 + $0x3c] sm:$0xf]
  %v674 = vld [vmem:[%s6] sm:$0x1]
  %v676 = vlaneseq
  %v677 = vshrl.u32 %v676, 7
  %v678 = vsub.s32 0, %v677
  %v679 = vrot.slane %v674, %v678
  %v697 = vunpack.c.l.b16 %v658
  %v698 = vunpack.c.l.b16 %v659
  %v699 = vunpack.c.l.b16 %v660
  %v700 = vunpack.c.l.b16 %v661
  %v701 = vunpack.c.l.b16 %v662
  %v702 = vunpack.c.l.b16 %v663
  %v703 = vunpack.c.l.b16 %v664
  %v704 = vunpack.c.l.b16 %v665
  %v705 = vunpack.c.l.b16 %v666
  %v706 = vunpack.c.l.b16 %v667
  %v707 = vunpack.c.l.b16 %v668
  %v708 = vunpack.c.l.b16 %v669
  %v709 = vunpack.c.l.b16 %v670
  %v710 = vunpack.c.l.b16 %v671
  %v711 = vunpack.c.l.b16 %v672
  %v712 = vunpack.c.l.b16 %v673
  %v713 = vpack.c.b16 %v698, %v697
  %v714 = vpack.c.b16 %v700, %v699
  %v715 = vpack.c.b16 %v702, %v701
  %v716 = vpack.c.b16 %v704, %v703
  %v717 = vpack.c.b16 %v706, %v705
  %v718 = vpack.c.b16 %v708, %v707
  %v719 = vpack.c.b16 %v710, %v709
  %v720 = vpack.c.b16 %v712, %v711
  %729 = vmatprep.subr.bf16.mxu0 0
  %730 = vmatpush1.bf16.msra.mxu0 %v720
  %731 = vmatprep.subr.bf16.mxu0 0
  %732 = vmatpush1.bf16.msra.mxu0 %v719
  %733 = vmatprep.subr.bf16.mxu0 0
  %734 = vmatpush1.bf16.msra.mxu0 %v718
  %735 = vmatprep.subr.bf16.mxu0 0
  %736 = vmatpush1.bf16.msra.mxu0 %v717
  %737 = vmatprep.subr.bf16.mxu0 0
  %738 = vmatpush1.bf16.msra.mxu0 %v716
  %739 = vmatprep.subr.bf16.mxu0 0
  %740 = vmatpush1.bf16.msra.mxu0 %v715
  %741 = vmatprep.subr.bf16.mxu0 0
  %742 = vmatpush1.bf16.msra.mxu0 %v714
  %743 = vmatprep.subr.bf16.mxu0 0
  %744 = vmatpush1.bf16.msra.mxu0 %v713
  %745 = vmatprep.subr.bf16.mxu0 0
  %746 = vmatpush2.bf16.msra.mxu0 0
  %747 = vmatprep.subr.bf16.mxu0 0
  %748 = vmatpush2.bf16.msra.mxu0 0
  %749 = vmatprep.subr.bf16.mxu0 0
  %750 = vmatpush2.bf16.msra.mxu0 0
  %751 = vmatprep.subr.bf16.mxu0 0
  %752 = vmatpush2.bf16.msra.mxu0 0
  %753 = vmatprep.subr.bf16.mxu0 0
  %754 = vmatpush2.bf16.msra.mxu0 0
  %755 = vmatprep.subr.bf16.mxu0 0
  %756 = vmatpush2.bf16.msra.mxu0 0
  %757 = vmatprep.subr.bf16.mxu0 0
  %758 = vmatpush2.bf16.msra.mxu0 0
  %759 = vmatprep.subr.bf16.mxu0 0
  %760 = vmatpush2.bf16.msra.mxu0 0
  %761 = vmatprep.mubr.bf16.mxu0 0
  %762 = vmatmul.mubr.bf16.gmra.mxu0 %v642
  %v763 = vpop.f32.mrf.mxu0
  %v764 = vadd.f32 %v679, %v763
  %v765 = vpop.f32.mrf.mxu0
  %v766 = vpop.f32.mrf.mxu0
  %v767 = vadd.f32 %v679, %v766
  %v768 = vpop.f32.mrf.mxu0
  %769 = vmatprep.mubr.bf16.mxu0 0
  %770 = vmatmul.mubr.bf16.gmra.mxu0 %v643
  %v771 = vpop.f32.mrf.mxu0
  %v772 = vadd.f32 %v679, %v771
  %v773 = vpop.f32.mrf.mxu0
  %v774 = vpop.f32.mrf.mxu0
  %v775 = vadd.f32 %v679, %v774
  %v776 = vpop.f32.mrf.mxu0
  %777 = vmatprep.mubr.bf16.mxu0 0
  %778 = vmatmul.mubr.bf16.gmra.mxu0 %v644
  %v779 = vpop.f32.mrf.mxu0
  %v780 = vadd.f32 %v679, %v779
  %v781 = vpop.f32.mrf.mxu0
  %v782 = vpop.f32.mrf.mxu0
  %v783 = vadd.f32 %v679, %v782
  %v784 = vpop.f32.mrf.mxu0
  %785 = vmatprep.mubr.bf16.mxu0 0
  %786 = vmatmul.mubr.bf16.gmra.mxu0 %v645
  %v787 = vpop.f32.mrf.mxu0
  %v788 = vadd.f32 %v679, %v787
  %v789 = vpop.f32.mrf.mxu0
  %v790 = vpop.f32.mrf.mxu0
  %v791 = vadd.f32 %v679, %v790
  %v792 = vpop.f32.mrf.mxu0
  %793 = vmatprep.mubr.bf16.mxu0 0
  %794 = vmatmul.mubr.bf16.gmra.mxu0 %v646
  %v795 = vpop.f32.mrf.mxu0
  %v796 = vadd.f32 %v679, %v795
  %v797 = vpop.f32.mrf.mxu0
  %v798 = vpop.f32.mrf.mxu0
  %v799 = vadd.f32 %v679, %v798
  %v800 = vpop.f32.mrf.mxu0
  %801 = vmatprep.mubr.bf16.mxu0 0
  %802 = vmatmul.mubr.bf16.gmra.mxu0 %v647
  %v803 = vpop.f32.mrf.mxu0
  %v804 = vadd.f32 %v679, %v803
  %v805 = vpop.f32.mrf.mxu0
  %v806 = vpop.f32.mrf.mxu0
  %v807 = vadd.f32 %v679, %v806
  %v808 = vpop.f32.mrf.mxu0
  %809 = vmatprep.mubr.bf16.mxu0 0
  %810 = vmatmul.mubr.bf16.gmra.mxu0 %v648
  %v811 = vpop.f32.mrf.mxu0
  %v812 = vadd.f32 %v679, %v811
  %v813 = vpop.f32.mrf.mxu0
  %v814 = vpop.f32.mrf.mxu0
  %v815 = vadd.f32 %v679, %v814
  %v816 = vpop.f32.mrf.mxu0
  %817 = vmatprep.mubr.bf16.mxu0 0
  %818 = vmatmul.mubr.bf16.gmra.mxu0 %v649
  %v819 = vpop.f32.mrf.mxu0
  %v820 = vadd.f32 %v679, %v819
  %v821 = vpop.f32.mrf.mxu0
  %v822 = vpop.f32.mrf.mxu0
  %v823 = vadd.f32 %v679, %v822
  %v824 = vpop.f32.mrf.mxu0
  %825 = vmatprep.mubr.bf16.mxu0 0
  %826 = vmatmul.mubr.bf16.gmra.mxu0 %v650
  %v827 = vpop.f32.mrf.mxu0
  %v828 = vadd.f32 %v679, %v827
  %v829 = vpop.f32.mrf.mxu0
  %v830 = vpop.f32.mrf.mxu0
  %v831 = vadd.f32 %v679, %v830
  %v832 = vpop.f32.mrf.mxu0
  %833 = vmatprep.mubr.bf16.mxu0 0
  %834 = vmatmul.mubr.bf16.gmra.mxu0 %v651
  %v835 = vpop.f32.mrf.mxu0
  %v836 = vadd.f32 %v679, %v835
  %v837 = vpop.f32.mrf.mxu0
  %v838 = vpop.f32.mrf.mxu0
  %v839 = vadd.f32 %v679, %v838
  %v840 = vpop.f32.mrf.mxu0
  %841 = vmatprep.mubr.bf16.mxu0 0
  %842 = vmatmul.mubr.bf16.gmra.mxu0 %v652
  %v843 = vpop.f32.mrf.mxu0
  %v844 = vadd.f32 %v679, %v843
  %v845 = vpop.f32.mrf.mxu0
  %v846 = vpop.f32.mrf.mxu0
  %v847 = vadd.f32 %v679, %v846
  %v848 = vpop.f32.mrf.mxu0
  %849 = vmatprep.mubr.bf16.mxu0 0
  %850 = vmatmul.mubr.bf16.gmra.mxu0 %v653
  %v851 = vpop.f32.mrf.mxu0
  %v852 = vadd.f32 %v679, %v851
  %v853 = vpop.f32.mrf.mxu0
  %v854 = vpop.f32.mrf.mxu0
  %v855 = vadd.f32 %v679, %v854
  %v856 = vpop.f32.mrf.mxu0
  %857 = vmatprep.mubr.bf16.mxu0 0
  %858 = vmatmul.mubr.bf16.gmra.mxu0 %v654
  %v859 = vpop.f32.mrf.mxu0
  %v860 = vadd.f32 %v679, %v859
  %v861 = vpop.f32.mrf.mxu0
  %v862 = vpop.f32.mrf.mxu0
  %v863 = vadd.f32 %v679, %v862
  %v864 = vpop.f32.mrf.mxu0
  %865 = vmatprep.mubr.bf16.mxu0 0
  %866 = vmatmul.mubr.bf16.gmra.mxu0 %v655
  %v867 = vpop.f32.mrf.mxu0
  %v868 = vadd.f32 %v679, %v867
  %v869 = vpop.f32.mrf.mxu0
  %v870 = vpop.f32.mrf.mxu0
  %v871 = vadd.f32 %v679, %v870
  %v872 = vpop.f32.mrf.mxu0
  %873 = vmatprep.mubr.bf16.mxu0 0
  %874 = vmatmul.mubr.bf16.gmra.mxu0 %v656
  %v875 = vpop.f32.mrf.mxu0
  %v876 = vadd.f32 %v679, %v875
  %v877 = vpop.f32.mrf.mxu0
  %v878 = vpop.f32.mrf.mxu0
  %v879 = vadd.f32 %v679, %v878
  %v880 = vpop.f32.mrf.mxu0
  %881 = vmatprep.mubr.bf16.mxu0 0
  %882 = vmatmul.mubr.bf16.gmra.mxu0 %v657
  %v883 = vpop.f32.mrf.mxu0
  %v884 = vadd.f32 %v679, %v883
  %v885 = vpop.f32.mrf.mxu0
  %v886 = vpop.f32.mrf.mxu0
  %v887 = vadd.f32 %v679, %v886
  %v888 = vpop.f32.mrf.mxu0
  %889 = vdwg.mxu0
  %v890 = vmax.f32 %v764, 0.0
  %v891 = vmax.f32 %v767, 0.0
  %v892 = vmax.f32 %v772, 0.0
  %v893 = vmax.f32 %v775, 0.0
  %v894 = vmax.f32 %v780, 0.0
  %v895 = vmax.f32 %v783, 0.0
  %v896 = vmax.f32 %v788, 0.0
  %v897 = vmax.f32 %v791, 0.0
  %v898 = vmax.f32 %v796, 0.0
  %v899 = vmax.f32 %v799, 0.0
  %v900 = vmax.f32 %v804, 0.0
  %v901 = vmax.f32 %v807, 0.0
  %v902 = vmax.f32 %v812, 0.0
  %v903 = vmax.f32 %v815, 0.0
  %v904 = vmax.f32 %v820, 0.0
  %v905 = vmax.f32 %v823, 0.0
  %v906 = vmax.f32 %v828, 0.0
  %v907 = vmax.f32 %v831, 0.0
  %v908 = vmax.f32 %v836, 0.0
  %v909 = vmax.f32 %v839, 0.0
  %v910 = vmax.f32 %v844, 0.0
  %v911 = vmax.f32 %v847, 0.0
  %v912 = vmax.f32 %v852, 0.0
  %v913 = vmax.f32 %v855, 0.0
  %v914 = vmax.f32 %v860, 0.0
  %v915 = vmax.f32 %v863, 0.0
  %v916 = vmax.f32 %v868, 0.0
  %v917 = vmax.f32 %v871, 0.0
  %v918 = vmax.f32 %v876, 0.0
  %v919 = vmax.f32 %v879, 0.0
  %v920 = vmax.f32 %v884, 0.0
  %v921 = vmax.f32 %v887, 0.0
  %v922 = vld [vmem:[%s7] sm:$0xf]
  %v923 = vpack.c.bf16 %v891, %v890
  %v924 = vpack.c.bf16 %v893, %v892
  %v925 = vpack.c.bf16 %v895, %v894
  %v926 = vpack.c.bf16 %v897, %v896
  %v927 = vpack.c.bf16 %v899, %v898
  %v928 = vpack.c.bf16 %v901, %v900
  %v929 = vpack.c.bf16 %v903, %v902
  %v930 = vpack.c.bf16 %v905, %v904
  %v931 = vpack.c.bf16 %v907, %v906
  %v932 = vpack.c.bf16 %v909, %v908
  %v933 = vpack.c.bf16 %v911, %v910
  %v934 = vpack.c.bf16 %v913, %v912
  %v935 = vpack.c.bf16 %v915, %v914
  %v936 = vpack.c.bf16 %v917, %v916
  %v937 = vpack.c.bf16 %v919, %v918
  %v938 = vpack.c.bf16 %v921, %v920
  %939 = vmatprep.subr.bf16.mxu0 0
  %940 = vmatpush1.bf16.xpose.msra.mxu0 %v930
  %941 = vmatprep.subr.bf16.mxu0 0
  %942 = vmatpush1.bf16.xpose.msra.mxu0 %v929
  %943 = vmatprep.subr.bf16.mxu0 0
  %944 = vmatpush1.bf16.xpose.msra.mxu0 %v928
  %945 = vmatprep.subr.bf16.mxu0 0
  %946 = vmatpush1.bf16.xpose.msra.mxu0 %v927
  %947 = vmatprep.subr.bf16.mxu0 0
  %948 = vmatpush1.bf16.xpose.msra.mxu0 %v926
  %949 = vmatprep.subr.bf16.mxu0 0
  %950 = vmatpush1.bf16.xpose.msra.mxu0 %v925
  %951 = vmatprep.subr.bf16.mxu0 0
  %952 = vmatpush1.bf16.xpose.msra.mxu0 %v924
  %953 = vmatprep.subr.bf16.mxu0 0
  %954 = vmatpush1.bf16.xpose.msra.mxu0 %v923
  %955 = vmatprep.subr.bf16.mxu0 0
  %956 = vmatpush2.bf16.xpose.msra.mxu0 %v938
  %957 = vmatprep.subr.bf16.mxu0 0
  %958 = vmatpush2.bf16.xpose.msra.mxu0 %v937
  %959 = vmatprep.subr.bf16.mxu0 0
  %960 = vmatpush2.bf16.xpose.msra.mxu0 %v936
  %961 = vmatprep.subr.bf16.mxu0 0
  %962 = vmatpush2.bf16.xpose.msra.mxu0 %v935
  %963 = vmatprep.subr.bf16.mxu0 0
  %964 = vmatpush2.bf16.xpose.msra.mxu0 %v934
  %965 = vmatprep.subr.bf16.mxu0 0
  %966 = vmatpush2.bf16.xpose.msra.mxu0 %v933
  %967 = vmatprep.subr.bf16.mxu0 0
  %968 = vmatpush2.bf16.xpose.msra.mxu0 %v932
  %969 = vmatprep.subr.bf16.mxu0 0
  %970 = vmatpush2.bf16.xpose.msra.mxu0 %v931
  %971 = vmatprep.mubr.bf16.mxu0 0
  %972 = vmatmul.mubr.bf16.gmra.mxu0 %v922
  %v973 = vpop.f32.mrf.mxu0
  %v974 = vadd.f32 0.0, %v973
  %v975 = vpop.f32.mrf.mxu0
  %v976 = vadd.f32 0.0, %v975
  %v977 = vpop.f32.mrf.mxu0
  %v978 = vpop.f32.mrf.mxu0
  %979 = vdwg.mxu0
  %v980 = vld [vmem:[#allocation2] sm:$0x1]
  %982 = vset.pattern.permute.xlu0 0
  %983 = vperm.xlu0 %982, %v980
  %v984 = vpop.permute.xlu0 %983
  %v986 = vlaneseq
  %v987 = vshrl.u32 %v986, 7
  %v988 = vsub.s32 0, %v987
  %v989 = vrot.slane %v984, %v988
  %v990 = vadd.f32 %v974, %v989
  %v991 = vadd.f32 %v976, %v989
  %v994 = vcombine.low %v990, %v991
  %v996 = vunpack.c.l.s4 1966171168
  %v997 = vunpack.c.0.s8 %v996
  %v998 = vlaneseq
  %v999 = vshrl.u32 %v998, 7
  %v1000 = vsub.s32 %v997, %v999
  %v1001 = vrot.slane %v994, %v1000
  %v1003 = vunpack.c.l.s4 1966171168
  %v1004 = vunpack.c.0.s8 %v1003
  %v1005 = vlaneseq
  %v1006 = vshrl.u32 %v1005, 7
  %v1007 = vsub.s32 %v1004, %v1006
  %v1008 = vrot.slane %v1001, %v1007
  %v1010 = vlaneseq
  %vm1011 = vcmp.ge.s32.totalorder %v1010, 0
  %vm1012 = vcmp.lt.s32.totalorder %v1010, 256
  %vm1013 = vmand %vm1011, %vm1012
  %1014 = vst.msk [vmem:[%s9] sm:$0x3] %vm1013, %v1008
  // Predicated region
  $region38: #{value_network_forward.1} parent=0 // pred_check
    _
  $region39: #{value_network_forward.1} parent=0 // pred_check_branch
    %1016 = sbr.rel (0) target = $region41
  $region40: #{value_network_forward.1} parent=0 // pred_region
    _
  $region41: #{value_network_forward.1} parent=0 // pred_fallthru
    _
  // Predicated region
  $region42: #{value_network_forward.1} parent=0 // pred_check
    _
  $region43: #{value_network_forward.1} parent=0 // pred_check_branch
    %1018 = sbr.rel (0) target = $region45
  $region44: #{value_network_forward.1} parent=0 // pred_region
    _
  $region45: #{value_network_forward.1} parent=0 // pred_fallthru
    _

</llo_original>
